<compile_context>
chip_gen: v5e
topology: v5e:2x2
jax: 0.10.0
libtpu: 0.0.40
codegen_flags: <defaults>
</compile_context>

<pallas_src>
import functools

import jax
import jax.numpy as jnp
import numpy as np
from jax.experimental import pallas as pl
from jax.experimental.pallas import tpu as pltpu

PAD_ID = 0  # BERT [PAD] token id


def _pad_truncate_kernel(len_ref, ids_ref, out_ref, *, max_length, ids_cols):
    """out[b, j] = ids[b, j] if j < min(len[b], ids_cols, max_length) else PAD.

    len_ref : (TB, 1)          int32  raw per-row lengths (clamped here)
    ids_ref : (TB, ids_cols)   int    token ids visible to this block
    out_ref : (TB, max_length) int32
    """
    valid = jnp.minimum(
        len_ref[...].astype(jnp.int32),
        jnp.int32(min(ids_cols, max_length)),
    )                                                               # (TB, 1)
    ids = ids_ref[...].astype(jnp.int32)                            # (TB, ids_cols)
    col = jax.lax.broadcasted_iota(jnp.int32, out_ref.shape, 1)     # (TB, L)

    if ids_cols >= max_length:
        # Truncation / exact-width path.  When the input BlockSpec was
        # narrowed (128-aligned max_length) this slice is a no-op.
        vals = ids if ids_cols == max_length else ids[:, :max_length]
        out_ref[...] = jnp.where(col < valid, vals, jnp.int32(PAD_ID))
    else:
        # Padding path (S < max_length): write the PAD suffix and the masked
        # prefix as two disjoint static-slice stores (no lane-shifting concat).
        pad_w = max_length - ids_cols
        out_ref[:, ids_cols:] = jnp.full(
            (out_ref.shape[0], pad_w), PAD_ID, dtype=jnp.int32
        )
        out_ref[:, :ids_cols] = jnp.where(
            col[:, :ids_cols] < valid, ids, jnp.int32(PAD_ID)
        )


def _choose_batch_tile(batch, ids_cols, max_length):
    """Rows per block: ~4 MiB/int32 buffer, multiple of 8, >=2 grid steps
    when the batch allows it, preferring a tile that divides the batch."""
    widest = max(ids_cols, max_length)
    target_rows = max(8, (4 * 1024 * 1024) // (4 * widest))
    tb = max(8, (target_rows // 8) * 8)

    if tb >= batch:
        tb = batch

    # v7x has 2 TensorCores: make sure there are at least 2 grid steps to
    # shard across them (only when both halves are still >= 8 rows).
    if batch >= 16:
        half = (((batch + 1) // 2) // 8) * 8
        if 8 <= half < tb:
            tb = half

    # Prefer a tile that divides the batch (no ragged, mostly-OOB final block).
    if 0 < tb < batch and batch % tb != 0:
        for cand in range(tb, 7, -8):
            if batch % cand == 0:
                tb = cand
                break
    return tb


def tokenizer_forward(ids, lengths, max_length):
    """Emulates Tokenizer.forward on pre-numericized ids.

    ids      : (B, S) integer raw token-id buffer (ragged valid prefix per row)
    lengths  : (B,)   integer number of valid ids per row
    returns  : (B, max_length) int32 input_ids (truncated + zero-padded)
    """
    B, S = ids.shape
    if not jnp.issubdtype(ids.dtype, jnp.integer):
        ids = ids.astype(jnp.int32)
    lengths2d = lengths.astype(jnp.int32).reshape(B, 1)

    # Narrow the streamed input to the kept prefix when truncating and the
    # (8,128) lane constraint allows it (block width must be 128-aligned or
    # equal to S).  Real BERT max_length values (128/512) always qualify.
    if S > max_length and max_length % 128 == 0:
        ids_cols = max_length
    else:
        ids_cols = S

    TB = _choose_batch_tile(B, ids_cols, max_length)
    grid = (pl.cdiv(B, TB),)

    kernel = functools.partial(
        _pad_truncate_kernel, max_length=max_length, ids_cols=ids_cols
    )

    itemsize = max(ids.dtype.itemsize, 1)
    bytes_accessed = int(
        B * (ids_cols * itemsize + (max_length + 1) * 4)
    )
    # ids + out (+ lengths) per block, double-buffered, 2x headroom.
    per_copy = TB * (ids_cols + max_length + 8) * 4
    vmem_limit = int(min(max(4 * per_copy, 16 * 1024 * 1024), 48 * 1024 * 1024))

    return pl.pallas_call(
        kernel,
        out_shape=jax.ShapeDtypeStruct((B, max_length), jnp.int32),
        grid=grid,
        in_specs=[
            pl.BlockSpec((TB, 1), lambda i: (i, 0)),          # raw lengths
            pl.BlockSpec((TB, ids_cols), lambda i: (i, 0)),   # ids (narrowed)
        ],
        out_specs=pl.BlockSpec((TB, max_length), lambda i: (i, 0)),
        compiler_params=pltpu.CompilerParams(
            dimension_semantics=("parallel",),
            vmem_limit_bytes=vmem_limit,
        ),
        cost_estimate=pl.CostEstimate(
            flops=0, transcendentals=0, bytes_accessed=bytes_accessed
        ),
    )(lengths2d, ids)


def _numpy_reference(raw_ids, lengths, max_length):
    raw_np = np.asarray(raw_ids)
    len_np = np.asarray(lengths)
    B, S = raw_np.shape
    ref = np.full((B, max_length), PAD_ID, dtype=np.int32)
    for b in range(B):
        n = min(int(len_np[b]), S, max_length)
        ref[b, :n] = raw_np[b, :n]
    return ref


def _check(raw_ids, lengths, max_length):
    out = tokenizer_forward(raw_ids, lengths, max_length)
    out = jax.block_until_ready(out)
    np.testing.assert_array_equal(
        np.asarray(out), _numpy_reference(raw_ids, lengths, max_length)
    )
    assert out.shape == (raw_ids.shape[0], max_length)
    assert out.dtype == jnp.int32
    return out


if __name__ == "__main__":
    key = jax.random.PRNGKey(0)
    k1, k2, k3, k4, k5, k6 = jax.random.split(key, 6)

    # Case 1: truncation, non-128-aligned max_length (full-width fallback).
    B, S, MAX_LENGTH = 2, 24, 16
    raw_ids = jax.random.randint(k1, (B, S), 1000, 2000, dtype=jnp.int32)
    raw_ids = raw_ids.at[:, 0].set(101)                  # BERT [CLS]
    lengths = jnp.array([5, 20], dtype=jnp.int32)        # short row / long row
    _check(raw_ids, lengths, MAX_LENGTH)

    # Case 2: raw buffer narrower than max_length (padding path).
    S2, MAX2 = 8, 16
    raw_ids2 = jax.random.randint(k2, (B, S2), 1000, 2000, dtype=jnp.int32)
    raw_ids2 = raw_ids2.at[:, 0].set(101)
    lengths2 = jnp.array([3, 8], dtype=jnp.int32)
    _check(raw_ids2, lengths2, MAX2)

    # Case 3: BERT-like truncation with 128-aligned max_length -> narrowed
    # input BlockSpec + multi-step grid (both TensorCores on v7x).
    B3, S3, MAX3 = 32, 256, 128
    raw_ids3 = jax.random.randint(k3, (B3, S3), 1000, 30000, dtype=jnp.int32)
    raw_ids3 = raw_ids3.at[:, 0].set(101)
    lengths3 = jax.random.randint(k4, (B3,), 0, 300, dtype=jnp.int32)
    _check(raw_ids3, lengths3, MAX3)

    # Case 4: batch not a multiple of the chosen tile (ragged final block).
    B4 = 20
    raw_ids4 = jax.random.randint(k5, (B4, S3), 1000, 30000, dtype=jnp.int32)
    lengths4 = jax.random.randint(k6, (B4,), 0, 300, dtype=jnp.int32)
    _check(raw_ids4, lengths4, MAX3)

    print("KERNEL_OK")
</pallas_src>

<mosaic_0001>
module attributes {stable_mosaic.version = 11 : i64} {
  func.func @_pad_truncate_kernel(%arg0: i32, %arg1: memref<2x1xi32, #tpu.memory_space<vmem>>, %arg2: memref<2x24xi32, #tpu.memory_space<vmem>>, %arg3: memref<2x16xi32, #tpu.memory_space<vmem>>) attributes {dimension_semantics = [#tpu.dimension_semantics<parallel>], iteration_bounds = array<i64: 1>, scalar_prefetch = 0 : i64, scratch_operands = 0 : i64, tpu.core_type = #tpu.core_type<tc>, window_params = [{transform_indices = @transform_0, window_bounds = array<i64: 2, 1>}, {transform_indices = @transform_1, window_bounds = array<i64: 2, 24>}, {transform_indices = @transform_2, window_bounds = array<i64: 2, 16>}]} {
    %c0 = arith.constant 0 : index
    %c0_0 = arith.constant 0 : index
    %0 = vector.load %arg1[%c0, %c0_0] : memref<2x1xi32, #tpu.memory_space<vmem>>, vector<2x1xi32>
    %c16_i32 = arith.constant 16 : i32
    %1 = vector.broadcast %c16_i32 : i32 to vector<2x1xi32>
    %2 = arith.minsi %0, %1 : vector<2x1xi32>
    %c0_1 = arith.constant 0 : index
    %c0_2 = arith.constant 0 : index
    %3 = vector.load %arg2[%c0_1, %c0_2] : memref<2x24xi32, #tpu.memory_space<vmem>>, vector<2x24xi32>
    %4 = tpu.iota {dimensions = array<i32: 1>} : vector<2x16xi32>
    %5 = vector.extract_strided_slice %3 {offsets = [0, 0], sizes = [2, 16], strides = [1, 1]} : vector<2x24xi32> to vector<2x16xi32>
    %6 = vector.broadcast %2 : vector<2x1xi32> to vector<2x16xi32>
    %7 = arith.cmpi slt, %4, %6 : vector<2x16xi32>
    %c0_i32 = arith.constant 0 : i32
    %8 = vector.broadcast %c0_i32 : i32 to vector<2x16xi32>
    %9 = arith.select %7, %5, %8 : vector<2x16xi1>, vector<2x16xi32>
    %c0_3 = arith.constant 0 : index
    %c0_4 = arith.constant 0 : index
    %10 = vector.load %arg3[%c0_3, %c0_4] : memref<2x16xi32, #tpu.memory_space<vmem>>, vector<2x16xi32>
    tpu.vector_store %arg3[%c0_3, %c0_4], %9 {strides = array<i32>} : memref<2x16xi32, #tpu.memory_space<vmem>>, vector<2x16xi32>,
    return
  }
  func.func @transform_0(%arg0: i32) -> (i32, i32) {
    %c0_i32 = arith.constant 0 : i32
    %c0_i32_0 = arith.constant 0 : i32
    return %arg0, %c0_i32 : i32, i32
  }
  func.func @transform_1(%arg0: i32) -> (i32, i32) {
    %c0_i32 = arith.constant 0 : i32
    %c0_i32_0 = arith.constant 0 : i32
    return %arg0, %c0_i32 : i32, i32
  }
  func.func @transform_2(%arg0: i32) -> (i32, i32) {
    %c0_i32 = arith.constant 0 : i32
    %c0_i32_0 = arith.constant 0 : i32
    return %arg0, %c0_i32 : i32, i32
  }
}

</mosaic_0001>

<llo_original>
// kernel: tpu_custom_call.1
$region0: #{tpu_custom_call.1}
  #allocation0 [shape = 'u32[]', space=smem, size = 0x4, offset = 0x4, fixed_abs, tag = 'smem constant byte address 0x4 - core index']
  #allocation1 [shape = 'u32[72,128]{1,0:T(1,128)}', space=vmem, size = 0x9000, scoped, tag = 'internal scratch']
  %s0 = inlined_call_operand.vmem [shape: s32[2,1], index: 0, kind: input, shape index: {}]
  %s1 = inlined_call_operand.vmem [shape: s32[2,24], index: 1, kind: input, shape index: {}]
  %s2 = inlined_call_operand.hbm [shape: s32[2,16], index: 2, kind: output, shape index: {}]
  %s3 = sld [smem:[#allocation0]]
  $region18: #{tpu_custom_call.1} parent=0
    _
  %s5 = ssub.s32 1, %s3
  %s6 = scalar_select 0, %s5, %s3
  $region1: #{tpu_custom_call.1} parent=0
    #allocation2 [shape = 'u8[1024]{0}', space=vmem, size = 0x400, scoped, tag = 'output window, operand 0, single buffered']
    #allocation3 [shape = 's32[1]{0}', space=sflag, size = 0x4, scoped, tag = 'scoped memory for tpu_custom_call.1']
    %7 = vsyncpa [#allocation3], 0
    // Predicated region
    $region2: #{tpu_custom_call.1} parent=1 // pred_check
      _
    $region3: #{tpu_custom_call.1} parent=1 // pred_check_branch
      %9 = sbr.rel (0) target = $region5
    $region4: #{tpu_custom_call.1} parent=1 // pred_region
      _
    $region5: #{tpu_custom_call.1} parent=1 // pred_fallthru
      _
    // Predicated region
    $region6: #{tpu_custom_call.1} parent=1 // pred_check
      _
    $region7: #{tpu_custom_call.1} parent=1 // pred_check_branch
      %11 = sbr.rel (0) target = $region9
    $region8: #{tpu_custom_call.1} parent=1 // pred_region
      _
    $region9: #{tpu_custom_call.1} parent=1 // pred_fallthru
      _
    %v12 = vld [vmem:[%s0] sm:$0x3]
    %vm13 = vcmp.lt.s32.totalorder %v12, 16
    %v14 = vsel %vm13, %v12, 16
    %v15 = vld [vmem:[%s1] sm:$0x3]
    %v16 = vlaneseq
    %v17 = vand.u32 %v16, 127
    %18 = vset.pattern.permute.xlu0 0
    %19 = vperm.xlu0 %18, %v14
    %v20 = vpop.permute.xlu0 %19
    %vm21 = vcmp.lt.s32.totalorder %v17, %v20
    %v22 = vsel %vm21, %v15, 0
    %vm23 = vcmask 123904
    %24 = vst.msk [vmem:[#allocation2] sm:$0x3] %vm23, %v22
    // Predicated region
    $region10: #{tpu_custom_call.1} parent=1 // pred_check
      _
    $region11: #{tpu_custom_call.1} parent=1 // pred_check_branch
      %26 = sbr.rel (0) target = $region13
    $region12: #{tpu_custom_call.1} parent=1 // pred_region
      %28 = vsyncadd [#allocation3], 0
      %s30 = sshll.u32 [#allocation2], 4
      %s31 = int_to_ptr.vmem [resolvable:$true] %s30
      %s32 = sshll.u32 %s2, 4
      %s33 = int_to_ptr.hbm [resolvable:$true] %s32
      %35 = dma.vmem_to_hbm [thread:$0]  %s31, 32, %s33, [#allocation3]
    $region13: #{tpu_custom_call.1} parent=1 // pred_fallthru
      _
    // Predicated region
    $region14: #{tpu_custom_call.1} parent=1 // pred_check
      _
    $region15: #{tpu_custom_call.1} parent=1 // pred_check_branch
      %37 = sbr.rel (0) target = $region17
    $region16: #{tpu_custom_call.1} parent=1 // pred_region
      %39 = dma.done [#allocation3], 32
    $region17: #{tpu_custom_call.1} parent=1 // pred_fallthru
      _
    %40 = vsyncpa [#allocation3], 1

</llo_original>
